<compile_context>
chip_gen: v5e
topology: v5e:2x2
jax: 0.10.0
libtpu: 0.0.40
codegen_flags: <defaults>
</compile_context>

<pallas_src>
import functools

import jax
import jax.numpy as jnp
from jax.experimental import pallas as pl
from jax.experimental.pallas import tpu as pltpu


def _sigmoid(z):
    # Exact f32 sigmoid; exp routes to the (otherwise idle) EUP slot.
    return 1.0 / (1.0 + jnp.exp(-z))


def chattn_kernel(x_ref, w1t_ref, b1_ref, w2t_ref, b2_ref, o_ref, acc_ref, *, inv_s):
    # x_ref:   (1, C, TILE_S) f32 block of the padded (N, C, S_pad) volume
    # w1t/w2t: (C, C) f32, pre-transposed conv weights (so matmul is plain A @ W^T)
    # b1/b2:   (1, C) f32
    # o_ref:   (1, 1, C) f32 output block for this batch element
    # acc_ref: (1, C) f32 running spatial sum (persists across the S grid axis)
    s = pl.program_id(1)

    @pl.when(s == 0)
    def _init():
        acc_ref[...] = jnp.zeros_like(acc_ref)

    # Partial spatial sum for this tile (lane-axis reduce).  Padded lanes are zero,
    # so they do not bias the sum.
    acc_ref[...] += jnp.sum(x_ref[...], axis=-1)

    @pl.when(s == pl.num_programs(1) - 1)
    def _finalize():
        # AdaptiveAvgPool3d(1): divide running sum by the true (unpadded) S.
        pooled = acc_ref[...] * inv_s                                    # (1, C)
        # Conv3d(dim, dim, 1) == pooled @ W1^T + b1  (weights pre-transposed)
        z1 = jnp.dot(pooled, w1t_ref[...],
                     preferred_element_type=jnp.float32) + b1_ref[...]   # (1, C)
        z1 = z1 * _sigmoid(z1)                                           # SiLU
        z2 = jnp.dot(z1, w2t_ref[...],
                     preferred_element_type=jnp.float32) + b2_ref[...]   # (1, C)
        o_ref[...] = _sigmoid(z2)[None].astype(o_ref.dtype)              # (1, 1, C)


def chattn_forward(x, w1, b1, w2, b2, *, tile_s=1024):
    """x: (N, C, D, H, W) float32 -> (N, C, 1, 1, 1) float32."""
    N, C, D, H, W = x.shape
    S = D * H * W
    x3 = x.reshape(N, C, S).astype(jnp.float32)

    # Spatial tile: multiple of 128 lanes, clamped to (padded) S.
    ts = int(min(tile_s, ((S + 127) // 128) * 128))
    ts = ((ts + 127) // 128) * 128
    num_s = pl.cdiv(S, ts)
    s_pad = num_s * ts
    if s_pad != S:
        # Zero-pad the spatial axis; the mean divides by the true S, so padding is unbiased.
        x3 = jnp.pad(x3, ((0, 0), (0, 0), (0, s_pad - S)))

    # Pre-transpose conv weights at trace time (no in-kernel XLU transpose).
    w1t = jnp.asarray(w1, jnp.float32).T
    w2t = jnp.asarray(w2, jnp.float32).T
    b1_2d = jnp.asarray(b1, jnp.float32).reshape(1, C)
    b2_2d = jnp.asarray(b2, jnp.float32).reshape(1, C)

    # VMEM budget: double-buffered x tile + resident weights/biases + out + scratch.
    need = (2 * C * ts * 4          # x tile, double-buffered
            + 2 * C * C * 4         # two weight matrices
            + 2 * C * 4             # biases
            + 2 * 1 * C * 4         # output block, double-buffered
            + 1 * C * 4)            # accumulator scratch
    vmem_limit = int(min(max(2 * need, 8 << 20), 48 << 20))

    kernel = functools.partial(chattn_kernel, inv_s=float(1.0 / S))

    out = pl.pallas_call(
        kernel,
        out_shape=jax.ShapeDtypeStruct((N, 1, C), jnp.float32),
        grid_spec=pltpu.PrefetchScalarGridSpec(
            num_scalar_prefetch=0,
            grid=(N, num_s),
            in_specs=[
                pl.BlockSpec((1, C, ts), lambda n, s: (n, 0, s)),   # x3 tile
                pl.BlockSpec((C, C), lambda n, s: (0, 0)),          # w1^T (resident)
                pl.BlockSpec((1, C), lambda n, s: (0, 0)),          # b1
                pl.BlockSpec((C, C), lambda n, s: (0, 0)),          # w2^T (resident)
                pl.BlockSpec((1, C), lambda n, s: (0, 0)),          # b2
            ],
            out_specs=pl.BlockSpec((1, 1, C), lambda n, s: (n, 0, 0)),
            scratch_shapes=[pltpu.VMEM((1, C), jnp.float32)],
        ),
        compiler_params=pltpu.CompilerParams(
            dimension_semantics=("parallel", "arbitrary"),
            vmem_limit_bytes=vmem_limit,
        ),
    )(x3, w1t, b1_2d, w2t, b2_2d)

    return out.reshape(N, C, 1, 1, 1)


def _reference(x, w1, b1, w2, b2):
    # Pure-JAX reference of the PyTorch forward.
    pooled = jnp.mean(x, axis=(2, 3, 4))                 # (N, C)
    z1 = pooled @ w1.T + b1
    z1 = z1 * jax.nn.sigmoid(z1)
    z2 = z1 @ w2.T + b2
    return jax.nn.sigmoid(z2)[:, :, None, None, None]


if __name__ == "__main__":
    # Small shapes consistent with the module (dim = channels).
    # S = 6*10*11 = 660 -> exercises both multi-tile reduction and padding of the last tile.
    N, C, D, H, W = 2, 64, 6, 10, 11

    key = jax.random.PRNGKey(0)
    kx, kw1, kb1, kw2, kb2 = jax.random.split(key, 5)

    x = jax.random.normal(kx, (N, C, D, H, W), dtype=jnp.float32)
    # Conv3d(dim, dim, 1) weights are (C_out, C_in, 1, 1, 1); keep them as (C, C).
    w1 = jax.random.normal(kw1, (C, C), dtype=jnp.float32) * 0.1
    b1 = jax.random.normal(kb1, (C,), dtype=jnp.float32) * 0.1
    w2 = jax.random.normal(kw2, (C, C), dtype=jnp.float32) * 0.1
    b2 = jax.random.normal(kb2, (C,), dtype=jnp.float32) * 0.1

    out = chattn_forward(x, w1, b1, w2, b2, tile_s=512)
    out = jax.block_until_ready(out)

    ref = _reference(x, w1, b1, w2, b2)
    assert out.shape == (N, C, 1, 1, 1)
    assert jnp.allclose(out, ref, atol=1e-5, rtol=1e-5), "mismatch vs reference"

    print("KERNEL_OK")
</pallas_src>

<mosaic_0001>
module attributes {stable_mosaic.version = 11 : i64} {
  func.func @chattn_kernel(%arg0: i32, %arg1: i32, %arg2: memref<1x64x512xf32, #tpu.memory_space<vmem>>, %arg3: memref<64x64xf32, #tpu.memory_space<vmem>>, %arg4: memref<1x64xf32, #tpu.memory_space<vmem>>, %arg5: memref<64x64xf32, #tpu.memory_space<vmem>>, %arg6: memref<1x64xf32, #tpu.memory_space<vmem>>, %arg7: memref<1x1x64xf32, #tpu.memory_space<vmem>>, %arg8: memref<1x64xf32, #tpu.memory_space<vmem>>) attributes {dimension_semantics = [#tpu.dimension_semantics<parallel>, #tpu.dimension_semantics<arbitrary>], iteration_bounds = array<i64: 2, 2>, scalar_prefetch = 0 : i64, scratch_operands = 1 : i64, tpu.core_type = #tpu.core_type<tc>, window_params = [{transform_indices = @transform_0, window_bounds = array<i64: 1, 64, 512>}, {pipeline_mode = #tpu.pipeline_mode<synchronous>, transform_indices = @transform_1, window_bounds = array<i64: 64, 64>}, {pipeline_mode = #tpu.pipeline_mode<synchronous>, transform_indices = @transform_2, window_bounds = array<i64: 1, 64>}, {pipeline_mode = #tpu.pipeline_mode<synchronous>, transform_indices = @transform_3, window_bounds = array<i64: 64, 64>}, {pipeline_mode = #tpu.pipeline_mode<synchronous>, transform_indices = @transform_4, window_bounds = array<i64: 1, 64>}, {transform_indices = @transform_5, window_bounds = array<i64: 1, 1, 64>}]} {
    %c0_i32 = arith.constant 0 : i32
    %0 = arith.cmpi eq, %arg1, %c0_i32 : i32
    %1 = arith.extui %0 : i1 to i32
    %c0_i32_0 = arith.constant 0 : i32
    %2 = arith.cmpi ne, %1, %c0_i32_0 : i32
    scf.if %2 {
      %cst_8 = arith.constant 0.000000e+00 : f32
      %11 = vector.broadcast %cst_8 : f32 to vector<1x64xf32>
      %c0_9 = arith.constant 0 : index
      %c0_10 = arith.constant 0 : index
      %12 = vector.load %arg8[%c0_9, %c0_10] : memref<1x64xf32, #tpu.memory_space<vmem>>, vector<1x64xf32>
      tpu.vector_store %arg8[%c0_9, %c0_10], %11 {strides = array<i32>} : memref<1x64xf32, #tpu.memory_space<vmem>>, vector<1x64xf32>,
    } else {
    }
    %c0 = arith.constant 0 : index
    %c0_1 = arith.constant 0 : index
    %3 = vector.load %arg8[%c0, %c0_1] : memref<1x64xf32, #tpu.memory_space<vmem>>, vector<1x64xf32>
    %c0_2 = arith.constant 0 : index
    %c0_3 = arith.constant 0 : index
    %c0_4 = arith.constant 0 : index
    %4 = vector.load %arg2[%c0_2, %c0_3, %c0_4] : memref<1x64x512xf32, #tpu.memory_space<vmem>>, vector<1x64x512xf32>
    %cst = arith.constant dense<0.000000e+00> : vector<1x64xf32>
    %5 = vector.multi_reduction <add>, %4, %cst [2] : vector<1x64x512xf32> to vector<1x64xf32>
    %6 = arith.addf %3, %5 : vector<1x64xf32>
    %c0_5 = arith.constant 0 : index
    %c0_6 = arith.constant 0 : index
    %7 = vector.load %arg8[%c0_5, %c0_6] : memref<1x64xf32, #tpu.memory_space<vmem>>, vector<1x64xf32>
    tpu.vector_store %arg8[%c0_5, %c0_6], %6 {strides = array<i32>} : memref<1x64xf32, #tpu.memory_space<vmem>>, vector<1x64xf32>,
    %c1_i32 = arith.constant 1 : i32
    %8 = arith.cmpi eq, %arg1, %c1_i32 : i32
    %9 = arith.extui %8 : i1 to i32
    %c0_i32_7 = arith.constant 0 : i32
    %10 = arith.cmpi ne, %9, %c0_i32_7 : i32
    scf.if %10 {
      %c0_8 = arith.constant 0 : index
      %c0_9 = arith.constant 0 : index
      %11 = vector.load %arg8[%c0_8, %c0_9] : memref<1x64xf32, #tpu.memory_space<vmem>>, vector<1x64xf32>
      %cst_10 = arith.constant 0.00151515147 : f32
      %12 = vector.broadcast %cst_10 : f32 to vector<1x64xf32>
      %13 = arith.mulf %11, %12 : vector<1x64xf32>
      %c0_11 = arith.constant 0 : index
      %c0_12 = arith.constant 0 : index
      %14 = vector.load %arg3[%c0_11, %c0_12] : memref<64x64xf32, #tpu.memory_space<vmem>>, vector<64x64xf32>
      %cst_13 = arith.constant dense<0.000000e+00> : vector<1x64xf32>
      %15 = tpu.matmul %13, %14, %cst_13 {dimension_numbers = #tpu.dot_dimension_numbers<[1], [0], [0], [1], [0, 0, 1, 1], [], []>} : vector<1x64xf32>, vector<64x64xf32>, vector<1x64xf32> -> vector<1x64xf32>
      %c0_14 = arith.constant 0 : index
      %c0_15 = arith.constant 0 : index
      %16 = vector.load %arg4[%c0_14, %c0_15] : memref<1x64xf32, #tpu.memory_space<vmem>>, vector<1x64xf32>
      %17 = arith.addf %15, %16 : vector<1x64xf32>
      %cst_16 = arith.constant 0.000000e+00 : f32
      %18 = vector.broadcast %cst_16 : f32 to vector<1x64xf32>
      %19 = arith.subf %18, %17 : vector<1x64xf32>
      %20 = math.exp %19 : vector<1x64xf32>
      %cst_17 = arith.constant 1.000000e+00 : f32
      %21 = vector.broadcast %cst_17 : f32 to vector<1x64xf32>
      %22 = arith.addf %21, %20 : vector<1x64xf32>
      %cst_18 = arith.constant 1.000000e+00 : f32
      %23 = vector.broadcast %cst_18 : f32 to vector<1x64xf32>
      %24 = arith.divf %23, %22 : vector<1x64xf32>
      %25 = arith.mulf %17, %24 : vector<1x64xf32>
      %c0_19 = arith.constant 0 : index
      %c0_20 = arith.constant 0 : index
      %26 = vector.load %arg5[%c0_19, %c0_20] : memref<64x64xf32, #tpu.memory_space<vmem>>, vector<64x64xf32>
      %cst_21 = arith.constant dense<0.000000e+00> : vector<1x64xf32>
      %27 = tpu.matmul %25, %26, %cst_21 {dimension_numbers = #tpu.dot_dimension_numbers<[1], [0], [0], [1], [0, 0, 1, 1], [], []>} : vector<1x64xf32>, vector<64x64xf32>, vector<1x64xf32> -> vector<1x64xf32>
      %c0_22 = arith.constant 0 : index
      %c0_23 = arith.constant 0 : index
      %28 = vector.load %arg6[%c0_22, %c0_23] : memref<1x64xf32, #tpu.memory_space<vmem>>, vector<1x64xf32>
      %29 = arith.addf %27, %28 : vector<1x64xf32>
      %cst_24 = arith.constant 0.000000e+00 : f32
      %30 = vector.broadcast %cst_24 : f32 to vector<1x64xf32>
      %31 = arith.subf %30, %29 : vector<1x64xf32>
      %32 = math.exp %31 : vector<1x64xf32>
      %cst_25 = arith.constant 1.000000e+00 : f32
      %33 = vector.broadcast %cst_25 : f32 to vector<1x64xf32>
      %34 = arith.addf %33, %32 : vector<1x64xf32>
      %cst_26 = arith.constant 1.000000e+00 : f32
      %35 = vector.broadcast %cst_26 : f32 to vector<1x64xf32>
      %36 = arith.divf %35, %34 : vector<1x64xf32>
      %37 = vector.shape_cast %36 : vector<1x64xf32> to vector<1x1x64xf32>
      %c0_27 = arith.constant 0 : index
      %c0_28 = arith.constant 0 : index
      %c0_29 = arith.constant 0 : index
      %38 = vector.load %arg7[%c0_27, %c0_28, %c0_29] : memref<1x1x64xf32, #tpu.memory_space<vmem>>, vector<1x1x64xf32>
      tpu.vector_store %arg7[%c0_27, %c0_28, %c0_29], %37 {strides = array<i32>} : memref<1x1x64xf32, #tpu.memory_space<vmem>>, vector<1x1x64xf32>,
    } else {
    }
    return
  }
  func.func @transform_0(%arg0: i32, %arg1: i32) -> (i32, i32, i32) {
    %c0_i32 = arith.constant 0 : i32
    %c0_i32_0 = arith.constant 0 : i32
    return %arg0, %c0_i32, %arg1 : i32, i32, i32
  }
  func.func @transform_1(%arg0: i32, %arg1: i32) -> (i32, i32) {
    %c0_i32 = arith.constant 0 : i32
    %c0_i32_0 = arith.constant 0 : i32
    %c0_i32_1 = arith.constant 0 : i32
    return %c0_i32, %c0_i32_0 : i32, i32
  }
  func.func @transform_2(%arg0: i32, %arg1: i32) -> (i32, i32) {
    %c0_i32 = arith.constant 0 : i32
    %c0_i32_0 = arith.constant 0 : i32
    %c0_i32_1 = arith.constant 0 : i32
    return %c0_i32, %c0_i32_0 : i32, i32
  }
  func.func @transform_3(%arg0: i32, %arg1: i32) -> (i32, i32) {
    %c0_i32 = arith.constant 0 : i32
    %c0_i32_0 = arith.constant 0 : i32
    %c0_i32_1 = arith.constant 0 : i32
    return %c0_i32, %c0_i32_0 : i32, i32
  }
  func.func @transform_4(%arg0: i32, %arg1: i32) -> (i32, i32) {
    %c0_i32 = arith.constant 0 : i32
    %c0_i32_0 = arith.constant 0 : i32
    %c0_i32_1 = arith.constant 0 : i32
    return %c0_i32, %c0_i32_0 : i32, i32
  }
  func.func @transform_5(%arg0: i32, %arg1: i32) -> (i32, i32, i32) {
    %c0_i32 = arith.constant 0 : i32
    %c0_i32_0 = arith.constant 0 : i32
    %c0_i32_1 = arith.constant 0 : i32
    return %arg0, %c0_i32, %c0_i32_0 : i32, i32, i32
  }
}

</mosaic_0001>

<llo_original>
// kernel: tpu_custom_call.1
$region0: #{tpu_custom_call.1}
  #allocation0 [shape = 'u32[]', space=smem, size = 0x4, offset = 0x4, fixed_abs, tag = 'smem constant byte address 0x4 - core index']
  #allocation1 [shape = 'u32[72,128]{1,0:T(1,128)}', space=vmem, size = 0x9000, scoped, tag = 'internal scratch']
  #allocation2 [shape = 'f32[1,64]{1,0:T(1,128)}', space=vmem, size = 0x200, scoped, tag = 'scratch operand']
  %s0 = inlined_call_operand.hbm [shape: f32[2,64,1024], index: 0, kind: input, shape index: {}]
  %s1 = inlined_call_operand.hbm [shape: f32[64,64], index: 1, kind: input, shape index: {}]
  %s2 = inlined_call_operand.vmem [shape: f32[1,64], index: 2, kind: input, shape index: {}]
  %s3 = inlined_call_operand.hbm [shape: f32[64,64], index: 3, kind: input, shape index: {}]
  %s4 = inlined_call_operand.vmem [shape: f32[1,64], index: 4, kind: input, shape index: {}]
  %s5 = inlined_call_operand.hbm [shape: f32[2,1,64], index: 5, kind: output, shape index: {}]
  %s6 = sld [smem:[#allocation0]]
  $region73: #{tpu_custom_call.1} parent=0
    _
  %s8 = ssub.s32 1, %s6
  %s9 = scalar_select 0, %s8, %s6
  $region1: #{tpu_custom_call.1} parent=0
    #allocation3 [shape = 'u8[262144]{0}', space=vmem, size = 0x40000, scoped, tag = 'input window, operand 0']
    #allocation4 [shape = 's32[2]{0}', space=sflag, size = 0x8, scoped, tag = 'scoped memory for tpu_custom_call.1']
    #allocation5 [shape = 's32[2]{0}', space=sflag, size = 0x8, scoped, tag = 'scoped memory for tpu_custom_call.1']
    #allocation6 [shape = 'u8[32768]{0}', space=vmem, size = 0x8000, scoped, tag = 'input window, operand 1, single buffered']
    #allocation7 [shape = 's32[1]{0}', space=sflag, size = 0x4, scoped, tag = 'scoped memory for tpu_custom_call.1']
    #allocation8 [shape = 'u8[32768]{0}', space=vmem, size = 0x8000, scoped, tag = 'input window, operand 3, single buffered']
    #allocation9 [shape = 'u8[1024]{0}', space=vmem, size = 0x400, scoped, tag = 'output window, operand 0']
    %10 = vsyncpa [#allocation4], 0
    %s11 = scalar_lea.sflag [#allocation4], 1
    %12 = vsyncpa %s11, 0
    %13 = vsyncpa [#allocation7], 0
    %14 = vsyncpa [#allocation5], 0
    %s15 = scalar_lea.sflag [#allocation5], 1
    %16 = vsyncpa %s15, 0
    loop: start=0, step=1, limit=6
    $region2: #{tpu_custom_call.1} parent=1 // loop_pre_header
      _
    $region3: #{tpu_custom_call.1} parent=1 // loop_header
      %s18 = sphi 0, %s22
      %p19 = scmp.ge.s32.totalorder %s18, 6
      %s25 = sphi 0, %s37
      %s26 = sphi 0, %s33
      %s27 = sphi 0, %s25
      %s28 = sphi 0, %s26
      %s29 = sphi 0, %s27
      %s30 = sphi 0, %s28
      %s42 = sphi 0, %s44
      %s45 = sphi 0, %s42
      %s46 = sphi 0, %s45
      %s62 = sphi 0, %s46
      %s66 = sphi 0, %s66
      %s68 = sphi 0, %s66
      %s69 = sphi 0, %s68
      %s83 = sphi 0, %s69
      %s87 = sphi 0, %s87
      %s89 = sphi 0, %s87
      %s90 = sphi 0, %s89
      %s104 = sphi 0, %s90
      %s108 = sphi 0, %s108
      %s110 = sphi 0, %s108
      %s111 = sphi 0, %s110
      %s125 = sphi 0, %s111
      %s129 = sphi 0, %s129
      %s131 = sphi 0, %s129
      %s132 = sphi 0, %s131
      %s146 = sphi 0, %s132
      %s152 = sphi 0, %s154
      %s155 = sphi 0, %s152
      %s156 = sphi 0, %s155
      %s172 = sphi 0, %s156
    $region4: #{tpu_custom_call.1} parent=1 // loop_header_branch
      %21 = sbr.rel (%p19) target = $region8
    $region5: #{tpu_custom_call.1} parent=1 // loop_body
      %s23 = ssub.s32 %s18, 1
      %s24 = ssub.s32 %s18, 2
      %s31 = sadd.s32 1, %s26
      %p32 = scmp.ge.s32.totalorder %s31, 2
      %s33 = scalar_select %p32, 0, %s31
      %s34 = sadd.s32 1, %s25
      %s35 = scalar_select %p32, %s34, %s25
      %p36 = scmp.ge.s32.totalorder %s35, 2
      %s37 = scalar_select %p36, 0, %s35
      %s38 = ssub.s32 %s25, %s37
      %s39 = ssub.s32 %s26, %s33
      %s40 = sor.u32 %s38, %s39
      %p41 = scmp.eq.s32.totalorder %s40, 0
      %s43 = sadd.s32 %s42, 1
      %s44 = scalar_select %p41, %s42, %s43
      %p47 = pneg %p41
      %p48 = scmp.eq.s32.totalorder %s18, 3
      %p49 = por %p47, %p48
      %p50 = scmp.ne.s32.totalorder %s42, %s45
      %p51 = scmp.eq.s32.totalorder %s18, 0
      %p52 = por %p50, %p51
      %p53 = scmp.ne.s32.totalorder %s42, %s45
      %p54 = scmp.eq.s32.totalorder %s23, 3
      %p55 = por %p53, %p54
      %p56 = scmp.ne.s32.totalorder %s45, %s46
      %p57 = scmp.eq.s32.totalorder %s23, 0
      %p58 = por %p56, %p57
      %p59 = scmp.ne.s32.totalorder %s45, %s46
      %p60 = scmp.eq.s32.totalorder %s24, 3
      %p61 = por %p59, %p60
      %p63 = scmp.ne.s32.totalorder %s46, %s62
      %p64 = scmp.eq.s32.totalorder %s24, 0
      %p65 = por %p63, %p64
      %s67 = sadd.s32 %s66, 1
      %p70 = scmp.eq.s32.totalorder %s18, 3
      %p71 = scmp.ne.s32.totalorder %s66, %s68
      %p72 = scmp.eq.s32.totalorder %s18, 0
      %p73 = por %p71, %p72
      %p74 = scmp.ne.s32.totalorder %s66, %s68
      %p75 = scmp.eq.s32.totalorder %s23, 3
      %p76 = por %p74, %p75
      %p77 = scmp.ne.s32.totalorder %s68, %s69
      %p78 = scmp.eq.s32.totalorder %s23, 0
      %p79 = por %p77, %p78
      %p80 = scmp.ne.s32.totalorder %s68, %s69
      %p81 = scmp.eq.s32.totalorder %s24, 3
      %p82 = por %p80, %p81
      %p84 = scmp.ne.s32.totalorder %s69, %s83
      %p85 = scmp.eq.s32.totalorder %s24, 0
      %p86 = por %p84, %p85
      %s88 = sadd.s32 %s87, 1
      %p91 = scmp.eq.s32.totalorder %s18, 3
      %p92 = scmp.ne.s32.totalorder %s87, %s89
      %p93 = scmp.eq.s32.totalorder %s18, 0
      %p94 = por %p92, %p93
      %p95 = scmp.ne.s32.totalorder %s87, %s89
      %p96 = scmp.eq.s32.totalorder %s23, 3
      %p97 = por %p95, %p96
      %p98 = scmp.ne.s32.totalorder %s89, %s90
      %p99 = scmp.eq.s32.totalorder %s23, 0
      %p100 = por %p98, %p99
      %p101 = scmp.ne.s32.totalorder %s89, %s90
      %p102 = scmp.eq.s32.totalorder %s24, 3
      %p103 = por %p101, %p102
      %p105 = scmp.ne.s32.totalorder %s90, %s104
      %p106 = scmp.eq.s32.totalorder %s24, 0
      %p107 = por %p105, %p106
      %s109 = sadd.s32 %s108, 1
      %p112 = scmp.eq.s32.totalorder %s18, 3
      %p113 = scmp.ne.s32.totalorder %s108, %s110
      %p114 = scmp.eq.s32.totalorder %s18, 0
      %p115 = por %p113, %p114
      %p116 = scmp.ne.s32.totalorder %s108, %s110
      %p117 = scmp.eq.s32.totalorder %s23, 3
      %p118 = por %p116, %p117
      %p119 = scmp.ne.s32.totalorder %s110, %s111
      %p120 = scmp.eq.s32.totalorder %s23, 0
      %p121 = por %p119, %p120
      %p122 = scmp.ne.s32.totalorder %s110, %s111
      %p123 = scmp.eq.s32.totalorder %s24, 3
      %p124 = por %p122, %p123
      %p126 = scmp.ne.s32.totalorder %s111, %s125
      %p127 = scmp.eq.s32.totalorder %s24, 0
      %p128 = por %p126, %p127
      %s130 = sadd.s32 %s129, 1
      %p133 = scmp.eq.s32.totalorder %s18, 3
      %p134 = scmp.ne.s32.totalorder %s129, %s131
      %p135 = scmp.eq.s32.totalorder %s18, 0
      %p136 = por %p134, %p135
      %p137 = scmp.ne.s32.totalorder %s129, %s131
      %p138 = scmp.eq.s32.totalorder %s23, 3
      %p139 = por %p137, %p138
      %p140 = scmp.ne.s32.totalorder %s131, %s132
      %p141 = scmp.eq.s32.totalorder %s23, 0
      %p142 = por %p140, %p141
      %p143 = scmp.ne.s32.totalorder %s131, %s132
      %p144 = scmp.eq.s32.totalorder %s24, 3
      %p145 = por %p143, %p144
      %p147 = scmp.ne.s32.totalorder %s132, %s146
      %p148 = scmp.eq.s32.totalorder %s24, 0
      %p149 = por %p147, %p148
      %s150 = ssub.s32 %s25, %s37
      %p151 = scmp.eq.s32.totalorder %s150, 0
      %s153 = sadd.s32 %s152, 1
      %s154 = scalar_select %p151, %s152, %s153
      %p157 = pneg %p151
      %p158 = scmp.eq.s32.totalorder %s18, 3
      %p159 = por %p157, %p158
      %p160 = scmp.ne.s32.totalorder %s152, %s155
      %p161 = scmp.eq.s32.totalorder %s18, 0
      %p162 = por %p160, %p161
      %p163 = scmp.ne.s32.totalorder %s152, %s155
      %p164 = scmp.eq.s32.totalorder %s23, 3
      %p165 = por %p163, %p164
      %p166 = scmp.ne.s32.totalorder %s155, %s156
      %p167 = scmp.eq.s32.totalorder %s23, 0
      %p168 = por %p166, %p167
      %p169 = scmp.ne.s32.totalorder %s155, %s156
      %p170 = scmp.eq.s32.totalorder %s24, 3
      %p171 = por %p169, %p170
      %p173 = scmp.ne.s32.totalorder %s156, %s172
      %p174 = scmp.eq.s32.totalorder %s24, 0
      %p175 = por %p173, %p174
      %p176 = scmp.le.s32.totalorder 1, %s18
      %p177 = scmp.lt.s32.totalorder %s18, 5
      %p178 = pnand %p176, %p177
      %p179 = pneg %p178
      // Predicated region
      $region9: #{tpu_custom_call.1} parent=5 // pred_check
        _
      $region10: #{tpu_custom_call.1} parent=5 // pred_check_branch
        %181 = sbr.rel (%p178) target = $region12
      $region11: #{tpu_custom_call.1} parent=5 // pred_region
        %s182 = ssub.s32 %s18, 1
        // Predicated region
        $region13: #{tpu_custom_call.1} parent=11 // pred_check
          %p183 = pneg %p79
        $region14: #{tpu_custom_call.1} parent=11 // pred_check_branch
          %185 = sbr.rel (%p183) target = $region16
        $region15: #{tpu_custom_call.1} parent=11 // pred_region
          %187 = vsyncadd [#allocation7], 0
          %s188 = sshll.u32 %s1, 4
          %s189 = int_to_ptr.hbm [resolvable:$true] %s188
          %s190 = sshll.u32 [#allocation6], 4
          %s191 = int_to_ptr.vmem [resolvable:$true] %s190
          %196 = dma.hbm_to_vmem [thread:$0]  %s189, 1024, %s191, [#allocation7], 128, 128, 8
        $region16: #{tpu_custom_call.1} parent=11 // pred_fallthru
          _
        // Predicated region
        $region17: #{tpu_custom_call.1} parent=11 // pred_check
          %p197 = pneg %p100
        $region18: #{tpu_custom_call.1} parent=11 // pred_check_branch
          %199 = sbr.rel (%p197) target = $region20
        $region19: #{tpu_custom_call.1} parent=11 // pred_region
          _
        $region20: #{tpu_custom_call.1} parent=11 // pred_fallthru
          _
        // Predicated region
        $region21: #{tpu_custom_call.1} parent=11 // pred_check
          %p200 = pneg %p121
        $region22: #{tpu_custom_call.1} parent=11 // pred_check_branch
          %202 = sbr.rel (%p200) target = $region24
        $region23: #{tpu_custom_call.1} parent=11 // pred_region
          %204 = vsyncadd [#allocation7], 0
          %s205 = sshll.u32 %s3, 4
          %s206 = int_to_ptr.hbm [resolvable:$true] %s205
          %s207 = sshll.u32 [#allocation8], 4
          %s208 = int_to_ptr.vmem [resolvable:$true] %s207
          %213 = dma.hbm_to_vmem [thread:$0]  %s206, 1024, %s208, [#allocation7], 128, 128, 8
        $region24: #{tpu_custom_call.1} parent=11 // pred_fallthru
          _
        // Predicated region
        $region25: #{tpu_custom_call.1} parent=11 // pred_check
          %p214 = pneg %p142
        $region26: #{tpu_custom_call.1} parent=11 // pred_check_branch
          %216 = sbr.rel (%p214) target = $region28
        $region27: #{tpu_custom_call.1} parent=11 // pred_region
          _
        $region28: #{tpu_custom_call.1} parent=11 // pred_fallthru
          _
      $region12: #{tpu_custom_call.1} parent=5 // pred_fallthru
        _
      %p217 = scmp.lt.s32.totalorder %s18, 4
      // Predicated region
      $region29: #{tpu_custom_call.1} parent=5 // pred_check
        %p218 = pneg %p217
      $region30: #{tpu_custom_call.1} parent=5 // pred_check_branch
        %220 = sbr.rel (%p218) target = $region32
      $region31: #{tpu_custom_call.1} parent=5 // pred_region
        // Predicated region
        $region33: #{tpu_custom_call.1} parent=31 // pred_check
          %p221 = pneg %p52
        $region34: #{tpu_custom_call.1} parent=31 // pred_check_branch
          %223 = sbr.rel (%p221) target = $region36
        $region35: #{tpu_custom_call.1} parent=31 // pred_region
          %s224 = sand.u32 %s42, 1
          %s225 = scalar_lea.sflag [#allocation4], %s224
          %s226 = sand.u32 %s42, 1
          %s227 = smul.addr %s226, 256
          %s228 = scalar_lea.vmem [#allocation3], %s227
          %s229 = smul.u32 4, %s26
          %231 = vsyncadd %s225, 0
          %s232 = smul.addr %s25, 64
          %s233 = sadd.s32 %s229, %s232
          %s234 = smul.addr %s233, 8
          %s235 = scalar_lea.hbm %s0, %s234
          %s236 = sshll.u32 %s235, 4
          %s237 = int_to_ptr.hbm [resolvable:$true] %s236
          %s238 = sshll.u32 %s228, 4
          %s239 = int_to_ptr.vmem [resolvable:$true] %s238
          %244 = dma.hbm_to_vmem [thread:$0]  %s237, 4096, %s239, %s225, 1024, 512, 32
        $region36: #{tpu_custom_call.1} parent=31 // pred_fallthru
          _
      $region32: #{tpu_custom_call.1} parent=5 // pred_fallthru
        _
      %p245 = scmp.le.s32.totalorder 1, %s18
      %p246 = scmp.lt.s32.totalorder %s18, 5
      %p247 = pnand %p245, %p246
      %p248 = pneg %p247
      // Predicated region
      $region37: #{tpu_custom_call.1} parent=5 // pred_check
        _
      $region38: #{tpu_custom_call.1} parent=5 // pred_check_branch
        %250 = sbr.rel (%p247) target = $region40
      $region39: #{tpu_custom_call.1} parent=5 // pred_region
        %s251 = ssub.s32 %s18, 1
        %s252 = sand.u32 %s45, 1
        %s253 = scalar_lea.sflag [#allocation4], %s252
        %s254 = sand.u32 %s45, 1
        %s255 = smul.addr %s254, 256
        %s256 = scalar_lea.vmem [#allocation3], %s255
        // Predicated region
        $region41: #{tpu_custom_call.1} parent=39 // pred_check
          %p257 = pneg %p58
        $region42: #{tpu_custom_call.1} parent=39 // pred_check_branch
          %259 = sbr.rel (%p257) target = $region44
        $region43: #{tpu_custom_call.1} parent=39 // pred_region
          %261 = dma.done %s253, 4096
        $region44: #{tpu_custom_call.1} parent=39 // pred_fallthru
          _
        // Predicated region
        $region45: #{tpu_custom_call.1} parent=39 // pred_check
          %p262 = pneg %p79
        $region46: #{tpu_custom_call.1} parent=39 // pred_check_branch
          %264 = sbr.rel (%p262) target = $region48
        $region47: #{tpu_custom_call.1} parent=39 // pred_region
          %266 = dma.done [#allocation7], 1024
        $region48: #{tpu_custom_call.1} parent=39 // pred_fallthru
          _
        // Predicated region
        $region49: #{tpu_custom_call.1} parent=39 // pred_check
          %p267 = pneg %p121
        $region50: #{tpu_custom_call.1} parent=39 // pred_check_branch
          %269 = sbr.rel (%p267) target = $region52
        $region51: #{tpu_custom_call.1} parent=39 // pred_region
          %271 = dma.done [#allocation7], 1024
        $region52: #{tpu_custom_call.1} parent=39 // pred_fallthru
          _
        %s272 = sand.u32 %s45, 1
        %s273 = scalar_lea.sflag [#allocation4], %s272
        %s274 = sand.u32 %s45, 1
        %s275 = smul.addr %s274, 256
        %s276 = scalar_lea.vmem [#allocation3], %s275
        %p277 = pneg %p58
        %p278 = pneg %p55
        %p279 = pneg %p79
        %p280 = pneg %p76
        %p281 = pneg %p100
        %p282 = pneg %p97
        %p283 = pneg %p121
        %p284 = pneg %p118
        %p285 = pneg %p142
        %p286 = pneg %p139
        %p287 = pneg %p168
        %p288 = pneg %p165
        %s289 = sand.u32 %s155, 1
        %s290 = scalar_lea.sflag [#allocation5], %s289
        %s291 = sand.u32 %s155, 1
        %s292 = scalar_lea.vmem [#allocation9], %s291
        %s293 = smul.u32 4, %s28
        %p294 = scmp.eq.s32.totalorder %s28, 0
        // Predicated region
        $region53: #{tpu_custom_call.1} parent=39 // pred_check
          %p295 = pneg %p294
        $region54: #{tpu_custom_call.1} parent=39 // pred_check_branch
          %297 = sbr.rel (%p295) target = $region56
        $region55: #{tpu_custom_call.1} parent=39 // pred_region
          %vm298 = vcmask 516096
          %299 = vst.msk [vmem:[#allocation2] sm:$0x1] %vm298, 0.0
        $region56: #{tpu_custom_call.1} parent=39 // pred_fallthru
          _
        %v300 = vld [vmem:[#allocation2] sm:$0x1]
        %v301 = vld [vmem:[%s256] sm:$0xff]
        %v302 = vld [vmem:[%s256 + $0x8] sm:$0xff]
        %v303 = vld [vmem:[%s256 + $0x10] sm:$0xff]
        %v304 = vld [vmem:[%s256 + $0x18] sm:$0xff]
        %v305 = vld [vmem:[%s256 + $0x20] sm:$0xff]
        %v306 = vld [vmem:[%s256 + $0x28] sm:$0xff]
        %v307 = vld [vmem:[%s256 + $0x30] sm:$0xff]
        %v308 = vld [vmem:[%s256 + $0x38] sm:$0xff]
        %v309 = vld [vmem:[%s256 + $0x40] sm:$0xff]
        %v310 = vld [vmem:[%s256 + $0x48] sm:$0xff]
        %v311 = vld [vmem:[%s256 + $0x50] sm:$0xff]
        %v312 = vld [vmem:[%s256 + $0x58] sm:$0xff]
        %v313 = vld [vmem:[%s256 + $0x60] sm:$0xff]
        %v314 = vld [vmem:[%s256 + $0x68] sm:$0xff]
        %v315 = vld [vmem:[%s256 + $0x70] sm:$0xff]
        %v316 = vld [vmem:[%s256 + $0x78] sm:$0xff]
        %v317 = vld [vmem:[%s256 + $0x80] sm:$0xff]
        %v318 = vld [vmem:[%s256 + $0x88] sm:$0xff]
        %v319 = vld [vmem:[%s256 + $0x90] sm:$0xff]
        %v320 = vld [vmem:[%s256 + $0x98] sm:$0xff]
        %v321 = vld [vmem:[%s256 + $0xa0] sm:$0xff]
        %v322 = vld [vmem:[%s256 + $0xa8] sm:$0xff]
        %v323 = vld [vmem:[%s256 + $0xb0] sm:$0xff]
        %v324 = vld [vmem:[%s256 + $0xb8] sm:$0xff]
        %v325 = vld [vmem:[%s256 + $0xc0] sm:$0xff]
        %v326 = vld [vmem:[%s256 + $0xc8] sm:$0xff]
        %v327 = vld [vmem:[%s256 + $0xd0] sm:$0xff]
        %v328 = vld [vmem:[%s256 + $0xd8] sm:$0xff]
        %v329 = vld [vmem:[%s256 + $0xe0] sm:$0xff]
        %v330 = vld [vmem:[%s256 + $0xe8] sm:$0xff]
        %v331 = vld [vmem:[%s256 + $0xf0] sm:$0xff]
        %v332 = vld [vmem:[%s256 + $0xf8] sm:$0xff]
        %v333 = vadd.f32 %v301, %v302
        %v334 = vadd.f32 %v333, %v303
        %v335 = vadd.f32 %v334, %v304
        %336 = vadd.xlane.f32.xlu0 %v335
        %v337 = vpop.xlane.xlu0 %336
        %v338 = vadd.f32 %v305, %v306
        %v339 = vadd.f32 %v338, %v307
        %v340 = vadd.f32 %v339, %v308
        %341 = vadd.xlane.f32.xlu0 %v340
        %v342 = vpop.xlane.xlu0 %341
        %v343 = vadd.f32 %v309, %v310
        %v344 = vadd.f32 %v343, %v311
        %v345 = vadd.f32 %v344, %v312
        %346 = vadd.xlane.f32.xlu0 %v345
        %v347 = vpop.xlane.xlu0 %346
        %v348 = vadd.f32 %v313, %v314
        %v349 = vadd.f32 %v348, %v315
        %v350 = vadd.f32 %v349, %v316
        %351 = vadd.xlane.f32.xlu0 %v350
        %v352 = vpop.xlane.xlu0 %351
        %v353 = vadd.f32 %v317, %v318
        %v354 = vadd.f32 %v353, %v319
        %v355 = vadd.f32 %v354, %v320
        %356 = vadd.xlane.f32.xlu0 %v355
        %v357 = vpop.xlane.xlu0 %356
        %v358 = vadd.f32 %v321, %v322
        %v359 = vadd.f32 %v358, %v323
        %v360 = vadd.f32 %v359, %v324
        %361 = vadd.xlane.f32.xlu0 %v360
        %v362 = vpop.xlane.xlu0 %361
        %v363 = vadd.f32 %v325, %v326
        %v364 = vadd.f32 %v363, %v327
        %v365 = vadd.f32 %v364, %v328
        %366 = vadd.xlane.f32.xlu0 %v365
        %v367 = vpop.xlane.xlu0 %366
        %v368 = vadd.f32 %v329, %v330
        %v369 = vadd.f32 %v368, %v331
        %v370 = vadd.f32 %v369, %v332
        %371 = vadd.xlane.f32.xlu0 %v370
        %v372 = vpop.xlane.xlu0 %371
        %v381 = vperm.slane %v337, 0
        %v382 = vperm.slane %v337, 1
        %v383 = vperm.slane %v337, 2
        %v384 = vperm.slane %v337, 3
        %v385 = vperm.slane %v337, 4
        %v386 = vperm.slane %v337, 5
        %v387 = vperm.slane %v337, 6
        %v388 = vperm.slane %v337, 7
        %v389 = vperm.slane %v342, 0
        %v390 = vperm.slane %v342, 1
        %v391 = vperm.slane %v342, 2
        %v392 = vperm.slane %v342, 3
        %v393 = vperm.slane %v342, 4
        %v394 = vperm.slane %v342, 5
        %v395 = vperm.slane %v342, 6
        %v396 = vperm.slane %v342, 7
        %v397 = vperm.slane %v347, 0
        %v398 = vperm.slane %v347, 1
        %v399 = vperm.slane %v347, 2
        %v400 = vperm.slane %v347, 3
        %v401 = vperm.slane %v347, 4
        %v402 = vperm.slane %v347, 5
        %v403 = vperm.slane %v347, 6
        %v404 = vperm.slane %v347, 7
        %v405 = vperm.slane %v352, 0
        %v406 = vperm.slane %v352, 1
        %v407 = vperm.slane %v352, 2
        %v408 = vperm.slane %v352, 3
        %v409 = vperm.slane %v352, 4
        %v410 = vperm.slane %v352, 5
        %v411 = vperm.slane %v352, 6
        %v412 = vperm.slane %v352, 7
        %v413 = vperm.slane %v357, 0
        %v414 = vperm.slane %v357, 1
        %v415 = vperm.slane %v357, 2
        %v416 = vperm.slane %v357, 3
        %v417 = vperm.slane %v357, 4
        %v418 = vperm.slane %v357, 5
        %v419 = vperm.slane %v357, 6
        %v420 = vperm.slane %v357, 7
        %v421 = vperm.slane %v362, 0
        %v422 = vperm.slane %v362, 1
        %v423 = vperm.slane %v362, 2
        %v424 = vperm.slane %v362, 3
        %v425 = vperm.slane %v362, 4
        %v426 = vperm.slane %v362, 5
        %v427 = vperm.slane %v362, 6
        %v428 = vperm.slane %v362, 7
        %v429 = vperm.slane %v367, 0
        %v430 = vperm.slane %v367, 1
        %v431 = vperm.slane %v367, 2
        %v432 = vperm.slane %v367, 3
        %v433 = vperm.slane %v367, 4
        %v434 = vperm.slane %v367, 5
        %v435 = vperm.slane %v367, 6
        %v436 = vperm.slane %v367, 7
        %v437 = vperm.slane %v372, 0
        %v438 = vperm.slane %v372, 1
        %v439 = vperm.slane %v372, 2
        %v440 = vperm.slane %v372, 3
        %v441 = vperm.slane %v372, 4
        %v442 = vperm.slane %v372, 5
        %v443 = vperm.slane %v372, 6
        %v444 = vperm.slane %v372, 7
        %445 = vst [vmem:[#allocation1] ss:$9 sm:$0xff] %v381
        %s446 = scalar_lea.vmem [#allocation1], 1
        %447 = vst [vmem:[%s446] ss:$9 sm:$0xff] %v382
        %s448 = scalar_lea.vmem [#allocation1], 2
        %449 = vst [vmem:[%s448] ss:$9 sm:$0xff] %v383
        %s450 = scalar_lea.vmem [#allocation1], 3
        %451 = vst [vmem:[%s450] ss:$9 sm:$0xff] %v384
        %s452 = scalar_lea.vmem [#allocation1], 4
        %453 = vst [vmem:[%s452] ss:$9 sm:$0xff] %v385
        %s454 = scalar_lea.vmem [#allocation1], 5
        %455 = vst [vmem:[%s454] ss:$9 sm:$0xff] %v386
        %s456 = scalar_lea.vmem [#allocation1], 6
        %457 = vst [vmem:[%s456] ss:$9 sm:$0xff] %v387
        %s458 = scalar_lea.vmem [#allocation1], 7
        %459 = vst [vmem:[%s458] ss:$9 sm:$0xff] %v388
        %v460 = vld [vmem:[#allocation1] sm:$0xff]
        %461 = vst [vmem:[#allocation1] ss:$9 sm:$0xff] %v389
        %462 = vst [vmem:[%s446] ss:$9 sm:$0xff] %v390
        %463 = vst [vmem:[%s448] ss:$9 sm:$0xff] %v391
        %464 = vst [vmem:[%s450] ss:$9 sm:$0xff] %v392
        %465 = vst [vmem:[%s452] ss:$9 sm:$0xff] %v393
        %466 = vst [vmem:[%s454] ss:$9 sm:$0xff] %v394
        %467 = vst [vmem:[%s456] ss:$9 sm:$0xff] %v395
        %468 = vst [vmem:[%s458] ss:$9 sm:$0xff] %v396
        %v469 = vld [vmem:[#allocation1] sm:$0xff]
        %470 = vst [vmem:[#allocation1] ss:$9 sm:$0xff] %v397
        %471 = vst [vmem:[%s446] ss:$9 sm:$0xff] %v398
        %472 = vst [vmem:[%s448] ss:$9 sm:$0xff] %v399
        %473 = vst [vmem:[%s450] ss:$9 sm:$0xff] %v400
        %474 = vst [vmem:[%s452] ss:$9 sm:$0xff] %v401
        %475 = vst [vmem:[%s454] ss:$9 sm:$0xff] %v402
        %476 = vst [vmem:[%s456] ss:$9 sm:$0xff] %v403
        %477 = vst [vmem:[%s458] ss:$9 sm:$0xff] %v404
        %v478 = vld [vmem:[#allocation1] sm:$0xff]
        %479 = vst [vmem:[#allocation1] ss:$9 sm:$0xff] %v405
        %480 = vst [vmem:[%s446] ss:$9 sm:$0xff] %v406
        %481 = vst [vmem:[%s448] ss:$9 sm:$0xff] %v407
        %482 = vst [vmem:[%s450] ss:$9 sm:$0xff] %v408
        %483 = vst [vmem:[%s452] ss:$9 sm:$0xff] %v409
        %484 = vst [vmem:[%s454] ss:$9 sm:$0xff] %v410
        %485 = vst [vmem:[%s456] ss:$9 sm:$0xff] %v411
        %486 = vst [vmem:[%s458] ss:$9 sm:$0xff] %v412
        %v487 = vld [vmem:[#allocation1] sm:$0xff]
        %488 = vst [vmem:[#allocation1] ss:$9 sm:$0xff] %v413
        %489 = vst [vmem:[%s446] ss:$9 sm:$0xff] %v414
        %490 = vst [vmem:[%s448] ss:$9 sm:$0xff] %v415
        %491 = vst [vmem:[%s450] ss:$9 sm:$0xff] %v416
        %492 = vst [vmem:[%s452] ss:$9 sm:$0xff] %v417
        %493 = vst [vmem:[%s454] ss:$9 sm:$0xff] %v418
        %494 = vst [vmem:[%s456] ss:$9 sm:$0xff] %v419
        %495 = vst [vmem:[%s458] ss:$9 sm:$0xff] %v420
        %v496 = vld [vmem:[#allocation1] sm:$0xff]
        %497 = vst [vmem:[#allocation1] ss:$9 sm:$0xff] %v421
        %498 = vst [vmem:[%s446] ss:$9 sm:$0xff] %v422
        %499 = vst [vmem:[%s448] ss:$9 sm:$0xff] %v423
        %500 = vst [vmem:[%s450] ss:$9 sm:$0xff] %v424
        %501 = vst [vmem:[%s452] ss:$9 sm:$0xff] %v425
        %502 = vst [vmem:[%s454] ss:$9 sm:$0xff] %v426
        %503 = vst [vmem:[%s456] ss:$9 sm:$0xff] %v427
        %504 = vst [vmem:[%s458] ss:$9 sm:$0xff] %v428
        %v505 = vld [vmem:[#allocation1] sm:$0xff]
        %506 = vst [vmem:[#allocation1] ss:$9 sm:$0xff] %v429
        %507 = vst [vmem:[%s446] ss:$9 sm:$0xff] %v430
        %508 = vst [vmem:[%s448] ss:$9 sm:$0xff] %v431
        %509 = vst [vmem:[%s450] ss:$9 sm:$0xff] %v432
        %510 = vst [vmem:[%s452] ss:$9 sm:$0xff] %v433
        %511 = vst [vmem:[%s454] ss:$9 sm:$0xff] %v434
        %512 = vst [vmem:[%s456] ss:$9 sm:$0xff] %v435
        %513 = vst [vmem:[%s458] ss:$9 sm:$0xff] %v436
        %v514 = vld [vmem:[#allocation1] sm:$0xff]
        %515 = vst [vmem:[#allocation1] ss:$9 sm:$0xff] %v437
        %516 = vst [vmem:[%s446] ss:$9 sm:$0xff] %v438
        %517 = vst [vmem:[%s448] ss:$9 sm:$0xff] %v439
        %518 = vst [vmem:[%s450] ss:$9 sm:$0xff] %v440
        %519 = vst [vmem:[%s452] ss:$9 sm:$0xff] %v441
        %520 = vst [vmem:[%s454] ss:$9 sm:$0xff] %v442
        %521 = vst [vmem:[%s456] ss:$9 sm:$0xff] %v443
        %522 = vst [vmem:[%s458] ss:$9 sm:$0xff] %v444
        %v523 = vld [vmem:[#allocation1] sm:$0xff]
        %524 = vset.pattern.permute.xlu0 0
        %525 = vperm.xlu0 %524, %v460
        %v526 = vpop.permute.xlu0 %525
        %527 = vset.pattern.permute.xlu0 0
        %528 = vperm.xlu0 %527, %v469
        %v529 = vpop.permute.xlu0 %528
        %530 = vset.pattern.permute.xlu0 0
        %531 = vperm.xlu0 %530, %v478
        %v532 = vpop.permute.xlu0 %531
        %533 = vset.pattern.permute.xlu0 0
        %534 = vperm.xlu0 %533, %v487
        %v535 = vpop.permute.xlu0 %534
        %536 = vset.pattern.permute.xlu0 0
        %537 = vperm.xlu0 %536, %v496
        %v538 = vpop.permute.xlu0 %537
        %539 = vset.pattern.permute.xlu0 0
        %540 = vperm.xlu0 %539, %v505
        %v541 = vpop.permute.xlu0 %540
        %542 = vset.pattern.permute.xlu0 0
        %543 = vperm.xlu0 %542, %v514
        %v544 = vpop.permute.xlu0 %543
        %545 = vset.pattern.permute.xlu0 0
        %546 = vperm.xlu0 %545, %v523
        %v547 = vpop.permute.xlu0 %546
        %v548 = vlaneseq
        %v549 = vand.u32 %v548, 127
        %v550 = vperm.slane %v526, %v549
        %v551 = vadd.s32 %v549, 4294967288
        %v552 = vperm.slane %v529, %v551
        %vm553 = vcmask 130112
        %v554 = vsel %vm553, %v552, %v550
        %v555 = vadd.s32 %v549, 4294967280
        %v556 = vperm.slane %v532, %v555
        %vm557 = vcmask 195712
        %v558 = vsel %vm557, %v556, %v554
        %v559 = vadd.s32 %v549, 4294967272
        %v560 = vperm.slane %v535, %v559
        %vm561 = vcmask 261312
        %v562 = vsel %vm561, %v560, %v558
        %v563 = vadd.s32 %v549, 4294967264
        %v564 = vperm.slane %v538, %v563
        %vm565 = vcmask 326912
        %v566 = vsel %vm565, %v564, %v562
        %v567 = vadd.s32 %v549, 4294967256
        %v568 = vperm.slane %v541, %v567
        %vm569 = vcmask 392512
        %v570 = vsel %vm569, %v568, %v566
        %v571 = vadd.s32 %v549, 4294967248
        %v572 = vperm.slane %v544, %v571
        %vm573 = vcmask 458112
        %v574 = vsel %vm573, %v572, %v570
        %v575 = vadd.s32 %v549, 4294967240
        %v576 = vperm.slane %v547, %v575
        %vm577 = vcmask 523712
        %v578 = vsel %vm577, %v576, %v574
        %v580 = vadd.f32 %v300, %v578
        %vm581 = vcmask 516096
        %582 = vst.msk [vmem:[#allocation2] sm:$0x1] %vm581, %v580
        %p583 = scmp.eq.s32.totalorder %s28, 1
        // Predicated region
        $region57: #{tpu_custom_call.1} parent=39 // pred_check
          %p584 = pneg %p583
        $region58: #{tpu_custom_call.1} parent=39 // pred_check_branch
          %586 = sbr.rel (%p584) target = $region60
        $region59: #{tpu_custom_call.1} parent=39 // pred_region
          %v587 = vld [vmem:[#allocation2] sm:$0x1]
          %v588 = vmul.f32 %v587, 0.0015151515
          %v589 = vld [vmem:[#allocation6] sm:$0xff]
          %v590 = vld [vmem:[#allocation6 + $0x8] sm:$0xff]
          %v591 = vld [vmem:[#allocation6 + $0x10] sm:$0xff]
          %v592 = vld [vmem:[#allocation6 + $0x18] sm:$0xff]
          %v593 = vld [vmem:[#allocation6 + $0x20] sm:$0xff]
          %v594 = vld [vmem:[#allocation6 + $0x28] sm:$0xff]
          %v595 = vld [vmem:[#allocation6 + $0x30] sm:$0xff]
          %v596 = vld [vmem:[#allocation6 + $0x38] sm:$0xff]
          %v597 = vld [vmem:[%s2] sm:$0x1]
          %vm598 = vcmask 523264
          %v600 = vsel %vm598, %v588, 0
          %602 = vmatpush.msra.mxu0 0.0
          %603 = vmatpush.msra.mxu0 0.0
          %604 = vmatpush.msra.mxu0 0.0
          %605 = vmatpush.msra.mxu0 0.0
          %606 = vmatpush.msra.mxu0 0.0
          %607 = vmatpush.msra.mxu0 0.0
          %608 = vmatpush.msra.mxu0 0.0
          %609 = vmatpush.msra.mxu0 0.0
          %610 = vmatpush.msra.mxu0 %v596
          %611 = vmatpush.msra.mxu0 %v595
          %612 = vmatpush.msra.mxu0 %v594
          %613 = vmatpush.msra.mxu0 %v593
          %614 = vmatpush.msra.mxu0 %v592
          %615 = vmatpush.msra.mxu0 %v591
          %616 = vmatpush.msra.mxu0 %v590
          %617 = vmatpush.msra.mxu0 %v589
          %618 = vmatmul.f32.gmra.mxu0 %v600
          %v619 = vpop.f32.mrf.mxu0
          %v620 = vadd.f32 %v597, %v619
          %621 = vdwg.mxu0
          %v622 = vsub.f32 0.0, %v620
          %v623 = vmul.f32 %v622, 1.442695
          %v624 = vpow.pop %v623
          %v625 = vadd.f32 %v624, 1.0
          %v626 = vrcp.pop %v625
          %v627 = vmul.f32 %v625, %v626
          %v628 = vsub.f32 1.0, %v627
          %v629 = vmul.f32 %v626, %v628
          %v630 = vadd.f32 %v626, %v629
          %vm631 = vweird.f32 %v625
          %vm632 = vweird.f32 %v626
          %vm633 = vmor %vm631, %vm632
          %v634 = vsel %vm633, %v626, %v630
          %v635 = vand.u32 2147483647, %v625
          %vm636 = vcmp.eq.f32.partialorder %v635, 8.507059e+37
          %v637 = vand.u32 %v625, 2147483648
          %v638 = vor.u32 1.1754944e-38, %v637
          %v639 = vsel %vm636, %v638, %v634
          %v640 = vmul.f32 1.0, %v639
          %v641 = vmul.f32 %v620, %v640
          %v642 = vld [vmem:[#allocation8] sm:$0xff]
          %v643 = vld [vmem:[#allocation8 + $0x8] sm:$0xff]
          %v644 = vld [vmem:[#allocation8 + $0x10] sm:$0xff]
          %v645 = vld [vmem:[#allocation8 + $0x18] sm:$0xff]
          %v646 = vld [vmem:[#allocation8 + $0x20] sm:$0xff]
          %v647 = vld [vmem:[#allocation8 + $0x28] sm:$0xff]
          %v648 = vld [vmem:[#allocation8 + $0x30] sm:$0xff]
          %v649 = vld [vmem:[#allocation8 + $0x38] sm:$0xff]
          %v650 = vld [vmem:[%s4] sm:$0x1]
          %v652 = vsel %vm598, %v641, 0
          %654 = vmatpush.msra.mxu0 0.0
          %655 = vmatpush.msra.mxu0 0.0
          %656 = vmatpush.msra.mxu0 0.0
          %657 = vmatpush.msra.mxu0 0.0
          %658 = vmatpush.msra.mxu0 0.0
          %659 = vmatpush.msra.mxu0 0.0
          %660 = vmatpush.msra.mxu0 0.0
          %661 = vmatpush.msra.mxu0 0.0
          %662 = vmatpush.msra.mxu0 %v649
          %663 = vmatpush.msra.mxu0 %v648
          %664 = vmatpush.msra.mxu0 %v647
          %665 = vmatpush.msra.mxu0 %v646
          %666 = vmatpush.msra.mxu0 %v645
          %667 = vmatpush.msra.mxu0 %v644
          %668 = vmatpush.msra.mxu0 %v643
          %669 = vmatpush.msra.mxu0 %v642
          %670 = vmatmul.f32.gmra.mxu0 %v652
          %v671 = vpop.f32.mrf.mxu0
          %v672 = vadd.f32 %v650, %v671
          %673 = vdwg.mxu0
          %v674 = vsub.f32 0.0, %v672
          %v675 = vmul.f32 %v674, 1.442695
          %v676 = vpow.pop %v675
          %v677 = vadd.f32 %v676, 1.0
          %v678 = vrcp.pop %v677
          %v679 = vmul.f32 %v677, %v678
          %v680 = vsub.f32 1.0, %v679
          %v681 = vmul.f32 %v678, %v680
          %v682 = vadd.f32 %v678, %v681
          %vm683 = vweird.f32 %v677
          %vm684 = vweird.f32 %v678
          %vm685 = vmor %vm683, %vm684
          %v686 = vsel %vm685, %v678, %v682
          %v687 = vand.u32 2147483647, %v677
          %vm688 = vcmp.eq.f32.partialorder %v687, 8.507059e+37
          %v689 = vand.u32 %v677, 2147483648
          %v690 = vor.u32 1.1754944e-38, %v689
          %v691 = vsel %vm688, %v690, %v686
          %v692 = vmul.f32 1.0, %v691
          %693 = vst.msk [vmem:[%s292] sm:$0x1] %vm581, %v692
        $region60: #{tpu_custom_call.1} parent=39 // pred_fallthru
          _
        %s694 = sand.u32 %s155, 1
        %s695 = scalar_lea.sflag [#allocation5], %s694
        %s696 = sand.u32 %s155, 1
        %s697 = scalar_lea.vmem [#allocation9], %s696
        // Predicated region
        $region61: #{tpu_custom_call.1} parent=39 // pred_check
          %p698 = pneg %p165
        $region62: #{tpu_custom_call.1} parent=39 // pred_check_branch
          %700 = sbr.rel (%p698) target = $region64
        $region63: #{tpu_custom_call.1} parent=39 // pred_region
          %702 = vsyncadd %s695, 0
          %s703 = scalar_lea.hbm %s5, %s27
          %s705 = sshll.u32 %s697, 4
          %s706 = int_to_ptr.vmem [resolvable:$true] %s705
          %s707 = sshll.u32 %s703, 4
          %s708 = int_to_ptr.hbm [resolvable:$true] %s707
          %710 = dma.vmem_to_hbm [thread:$0]  %s706, 16, %s708, %s695
        $region64: #{tpu_custom_call.1} parent=39 // pred_fallthru
          _
      $region40: #{tpu_custom_call.1} parent=5 // pred_fallthru
        _
      %p711 = scmp.le.s32.totalorder 2, %s18
      // Predicated region
      $region65: #{tpu_custom_call.1} parent=5 // pred_check
        %p712 = pneg %p711
      $region66: #{tpu_custom_call.1} parent=5 // pred_check_branch
        %714 = sbr.rel (%p712) target = $region68
      $region67: #{tpu_custom_call.1} parent=5 // pred_region
        %s715 = ssub.s32 %s18, 2
        // Predicated region
        $region69: #{tpu_custom_call.1} parent=67 // pred_check
          %p716 = pneg %p171
        $region70: #{tpu_custom_call.1} parent=67 // pred_check_branch
          %718 = sbr.rel (%p716) target = $region72
        $region71: #{tpu_custom_call.1} parent=67 // pred_region
          %s719 = sand.u32 %s156, 1
          %s720 = scalar_lea.sflag [#allocation5], %s719
          %s721 = sand.u32 %s156, 1
          %s722 = scalar_lea.vmem [#allocation9], %s721
          %724 = dma.done %s720, 16
        $region72: #{tpu_custom_call.1} parent=67 // pred_fallthru
          _
      $region68: #{tpu_custom_call.1} parent=5 // pred_fallthru
        _
    $region6: #{tpu_custom_call.1} parent=1 // loop_footer
      %s22 = sadd.s32 1, %s18
    $region7: #{tpu_custom_call.1} parent=1 // loop_footer_branch
      %17 = sbr.rel target = $region3
    $region8: #{tpu_custom_call.1} parent=1 // loop_exit
      _
    %725 = vsyncpa [#allocation4], 1
    %s726 = scalar_lea.sflag [#allocation4], 1
    %727 = vsyncpa %s726, 1
    %728 = vsyncpa [#allocation7], 1
    %729 = vsyncpa [#allocation5], 1
    %s730 = scalar_lea.sflag [#allocation5], 1
    %731 = vsyncpa %s730, 1

</llo_original>
